<compile_context>
chip_gen: v5e
topology: v5e:2x2
jax: 0.10.0
libtpu: 0.0.40
codegen_flags: <defaults>
</compile_context>

<pallas_src>
import jax
import jax.numpy as jnp
from jax.experimental import pallas as pl
from jax.experimental.pallas import tpu as pltpu

LN_EPS = 1e-5  # torch.nn.LayerNorm default


def _round_up(x, m):
    return (x + m - 1) // m * m


def _vmem_capacity():
    try:
        return int(pltpu.get_tpu_info().vmem_capacity_bytes)
    except Exception:
        return 64 << 20  # conservative fallback: v7x per-TensorCore VMEM


def _vmem_budget(capacity):
    # ~96 MiB on 128 MiB parts (v5e/v6e), ~40 MiB on 64 MiB parts (v7x).
    return min(capacity * 3 // 4, capacity - (24 << 20))


def _vmem_limit(est_bytes, capacity):
    return int(min(max(est_bytes + (8 << 20), 32 << 20), capacity - (4 << 20)))


# ---------------------- fused LayerNorm + Linear kernel ----------------------
def _fused_ln_linear_kernel(x_ref, g_ref, b_ref, w_ref, bias_ref, o_ref, y_ref):
    # Compute LayerNorm once per row tile (at the first column panel) into a
    # bf16 VMEM scratch; all column panels reuse it (no per-panel recompute).
    @pl.when(pl.program_id(1) == 0)
    def _():
        x = x_ref[...].astype(jnp.float32)                  # (TR, D)
        mean = jnp.mean(x, axis=-1, keepdims=True)
        xc = x - mean
        var = jnp.mean(xc * xc, axis=-1, keepdims=True)
        inv = jax.lax.rsqrt(var + LN_EPS)
        y = xc * inv * g_ref[...].astype(jnp.float32) + b_ref[...].astype(jnp.float32)
        y_ref[...] = y.astype(y_ref.dtype)                  # bf16 for the MXU

    acc = jnp.dot(y_ref[...], w_ref[...],                   # bf16 x bf16 -> f32
                  preferred_element_type=jnp.float32)
    o_ref[...] = (acc + bias_ref[...].astype(jnp.float32)).astype(o_ref.dtype)


def fused_layernorm_linear(x2d, gamma2d, beta2d, w, bias2d, *, max_tile_rows=1024):
    """y = LayerNorm(x2d) @ w + bias in one kernel. x2d: (R, D), w: (D, Dout)."""
    R, D = x2d.shape
    Din, Dout = w.shape
    assert Din == D
    x_itz = jnp.dtype(x2d.dtype).itemsize
    w_itz = jnp.dtype(w.dtype).itemsize
    cap = _vmem_capacity()
    budget = _vmem_budget(cap)

    # Column (N) tile: keep the whole weight VMEM-resident when it fits
    # comfortably, otherwise stream 512-wide column panels.
    Dout_p = _round_up(Dout, 128)
    tn = Dout_p if 2 * D * Dout_p * w_itz <= budget // 2 else min(512, Dout_p)

    # Row tile: dtype-aware alignment, as large as the VMEM budget allows,
    # never shrunk below 256 rows (MXU M-utilization) when R is large.
    align = max(8, 32 // x_itz)
    tr = min(max_tile_rows, _round_up(R, align))
    min_tr = min(256, _round_up(R, align))

    def est(tr_):
        return (2 * tr_ * D * x_itz        # x tile (double-buffered)
                + 2 * tr_ * tn * x_itz     # out tile (double-buffered)
                + 2 * D * tn * w_itz       # weight panel
                + tr_ * D * 2              # bf16 LN scratch
                + 2 * tn * 4 + 4 * D * 4)  # bias + gamma/beta

    while tr > min_tr and est(tr) > budget:
        tr //= 2
    tr = max(_round_up(tr, align), align)
    # TODO(synk): add a K (feature) grid axis with an f32 accumulator instead
    # of shrinking tr when D is huge (keeps M >= 256 for the v7x MXU).

    return pl.pallas_call(
        _fused_ln_linear_kernel,
        out_shape=jax.ShapeDtypeStruct((R, Dout), x2d.dtype),
        grid=(pl.cdiv(R, tr), pl.cdiv(Dout, tn)),
        in_specs=[
            pl.BlockSpec((tr, D), lambda i, j: (i, 0)),     # x row tile
            pl.BlockSpec((1, D), lambda i, j: (0, 0)),      # gamma (resident)
            pl.BlockSpec((1, D), lambda i, j: (0, 0)),      # beta  (resident)
            pl.BlockSpec((D, tn), lambda i, j: (0, j)),     # weight panel
            pl.BlockSpec((1, tn), lambda i, j: (0, j)),     # bias panel
        ],
        out_specs=pl.BlockSpec((tr, tn), lambda i, j: (i, j)),
        scratch_shapes=[pltpu.VMEM((tr, D), jnp.bfloat16)],
        compiler_params=pltpu.CompilerParams(
            dimension_semantics=("parallel", "arbitrary"),
            vmem_limit_bytes=_vmem_limit(est(tr), cap)),
    )(x2d, gamma2d, beta2d, w, bias2d)


# ------------------------- standalone LayerNorm kernel -----------------------
def _layernorm_kernel(x_ref, g_ref, b_ref, o_ref):
    x = x_ref[...].astype(jnp.float32)
    mean = jnp.mean(x, axis=-1, keepdims=True)
    xc = x - mean
    var = jnp.mean(xc * xc, axis=-1, keepdims=True)
    inv = jax.lax.rsqrt(var + LN_EPS)
    y = xc * inv * g_ref[...].astype(jnp.float32) + b_ref[...].astype(jnp.float32)
    o_ref[...] = y.astype(o_ref.dtype)


def layernorm(x2d, gamma2d, beta2d, *, max_tile_rows=1024):
    R, D = x2d.shape
    x_itz = jnp.dtype(x2d.dtype).itemsize
    cap = _vmem_capacity()
    budget = _vmem_budget(cap)
    align = max(8, 32 // x_itz)
    tr = min(max_tile_rows, _round_up(R, align))

    def est(tr_):
        return 4 * tr_ * D * x_itz + 4 * D * 4

    while tr > align and est(tr) > budget:
        tr //= 2
    tr = max(_round_up(tr, align), align)

    return pl.pallas_call(
        _layernorm_kernel,
        out_shape=jax.ShapeDtypeStruct((R, D), x2d.dtype),
        grid=(pl.cdiv(R, tr),),
        in_specs=[
            pl.BlockSpec((tr, D), lambda i: (i, 0)),
            pl.BlockSpec((1, D), lambda i: (0, 0)),
            pl.BlockSpec((1, D), lambda i: (0, 0)),
        ],
        out_specs=pl.BlockSpec((tr, D), lambda i: (i, 0)),
        compiler_params=pltpu.CompilerParams(
            dimension_semantics=("parallel",),
            vmem_limit_bytes=_vmem_limit(est(tr), cap)),
    )(x2d, gamma2d, beta2d)


# --------------------------- standalone Linear kernel ------------------------
def _linear_kernel(x_ref, w_ref, b_ref, o_ref):
    acc = jnp.dot(x_ref[...].astype(w_ref.dtype), w_ref[...],   # bf16 MXU
                  preferred_element_type=jnp.float32)
    o_ref[...] = (acc + b_ref[...].astype(jnp.float32)).astype(o_ref.dtype)


def linear(x2d, w, bias2d, *, max_tile_rows=1024):
    R, D = x2d.shape
    Din, Dout = w.shape
    assert Din == D
    x_itz = jnp.dtype(x2d.dtype).itemsize
    w_itz = jnp.dtype(w.dtype).itemsize
    cap = _vmem_capacity()
    budget = _vmem_budget(cap)

    Dout_p = _round_up(Dout, 128)
    tn = Dout_p if 2 * D * Dout_p * w_itz <= budget // 2 else min(512, Dout_p)

    align = max(8, 32 // x_itz)
    tr = min(max_tile_rows, _round_up(R, align))
    min_tr = min(256, _round_up(R, align))

    def est(tr_):
        return (2 * tr_ * D * x_itz + 2 * tr_ * tn * x_itz
                + 2 * D * tn * w_itz + 2 * tn * 4)

    while tr > min_tr and est(tr) > budget:
        tr //= 2
    tr = max(_round_up(tr, align), align)

    return pl.pallas_call(
        _linear_kernel,
        out_shape=jax.ShapeDtypeStruct((R, Dout), x2d.dtype),
        grid=(pl.cdiv(R, tr), pl.cdiv(Dout, tn)),
        in_specs=[
            pl.BlockSpec((tr, D), lambda i, j: (i, 0)),
            pl.BlockSpec((D, tn), lambda i, j: (0, j)),
            pl.BlockSpec((1, tn), lambda i, j: (0, j)),
        ],
        out_specs=pl.BlockSpec((tr, tn), lambda i, j: (i, j)),
        compiler_params=pltpu.CompilerParams(
            dimension_semantics=("parallel", "arbitrary"),
            vmem_limit_bytes=_vmem_limit(est(tr), cap)),
    )(x2d, w, bias2d)


# ----------------------------------- modules ---------------------------------
class PallasLinear:
    """Linear(d_in, d_out); weight kept bf16 so the MXU runs bf16 x bf16 with
    an f32 accumulator.  Fusable with the PreNorm LayerNorm."""

    def __init__(self, d_in, d_out, key=None, w=None, b=None,
                 param_dtype=jnp.bfloat16):
        if w is None:
            kw, kb = jax.random.split(key)
            w = jax.random.normal(kw, (d_in, d_out), jnp.float32) * 0.02
            b = jax.random.normal(kb, (d_out,), jnp.float32) * 0.02
        # Hoisted once at construction: dtype cast + (1, Dout) bias reshape.
        self.w = jnp.asarray(w, param_dtype)
        self.b = jnp.asarray(b, jnp.float32)
        self.b2d = self.b.reshape(1, d_out)

    def __call__(self, x):
        B, S, D = x.shape
        out = linear(x.reshape(B * S, D), self.w, self.b2d)
        return out.reshape(B, S, -1)


class PreNorm:
    """JAX/Pallas equivalent of:
         self.norm = nn.LayerNorm(dim); forward(x) = fn(norm(x), **kwargs)
    When fn is a PallasLinear, LN + Linear are fused into a single kernel."""

    def __init__(self, dim, fn):
        self.dim = dim
        self.fn = fn
        # nn.LayerNorm default init: weight=1, bias=0; kept lane-dense (1, D).
        self.gamma2d = jnp.ones((1, dim), jnp.float32)
        self.beta2d = jnp.zeros((1, dim), jnp.float32)

    def __call__(self, x, **kwargs):
        B, S, D = x.shape
        if D < 128:
            # Tiny feature dims can't fill the 128 lanes; plain XLA wins.
            mean = jnp.mean(x, axis=-1, keepdims=True)
            var = jnp.mean((x - mean) ** 2, axis=-1, keepdims=True)
            normed = ((x - mean) * jax.lax.rsqrt(var + LN_EPS)
                      * self.gamma2d.reshape(D) + self.beta2d.reshape(D))
            return self.fn(normed, **kwargs)
        x2d = x.reshape(B * S, D)
        if isinstance(self.fn, PallasLinear) and not kwargs:
            out2d = fused_layernorm_linear(x2d, self.gamma2d, self.beta2d,
                                           self.fn.w, self.fn.b2d)
            return out2d.reshape(B, S, -1)
        # Generic fn: standalone LN kernel, then the wrapped fn.
        normed = layernorm(x2d, self.gamma2d, self.beta2d).reshape(B, S, D)
        return self.fn(normed, **kwargs)


if __name__ == "__main__":
    B, S, D = 2, 16, 128
    key = jax.random.PRNGKey(0)
    kx, kf = jax.random.split(key)

    x = jax.random.normal(kx, (B, S, D), dtype=jnp.float32)
    fn = PallasLinear(D, D, key=kf)

    # Fused LN + Linear path.
    prenorm = PreNorm(D, fn)
    out = prenorm(x)
    jax.block_until_ready(out)

    # Generic-fn path (separate LN kernel + Linear kernel) for coverage.
    prenorm_generic = PreNorm(D, lambda h: fn(h))
    out2 = prenorm_generic(x)
    jax.block_until_ready(out2)

    # Pure-JAX reference of the same semantics (same bf16-rounded weight).
    mean = jnp.mean(x, axis=-1, keepdims=True)
    var = jnp.mean((x - mean) ** 2, axis=-1, keepdims=True)
    normed_ref = (x - mean) / jnp.sqrt(var + LN_EPS)
    ref = normed_ref @ fn.w.astype(jnp.float32) + fn.b

    assert out.shape == (B, S, D)
    # bf16 MXU operands with f32 accumulation -> loosened tolerance vs f32 ref.
    assert jnp.allclose(out, ref, atol=2e-2, rtol=2e-2), \
        float(jnp.max(jnp.abs(out - ref)))
    assert jnp.allclose(out2, ref, atol=2e-2, rtol=2e-2), \
        float(jnp.max(jnp.abs(out2 - ref)))

    print("KERNEL_OK")
</pallas_src>

<mosaic_0001>
module attributes {stable_mosaic.version = 11 : i64} {
  func.func @_fused_ln_linear_kernel(%arg0: i32, %arg1: i32, %arg2: memref<32x128xf32, #tpu.memory_space<vmem>>, %arg3: memref<1x128xf32, #tpu.memory_space<vmem>>, %arg4: memref<1x128xf32, #tpu.memory_space<vmem>>, %arg5: memref<128x128xbf16, #tpu.memory_space<vmem>>, %arg6: memref<1x128xf32, #tpu.memory_space<vmem>>, %arg7: memref<32x128xf32, #tpu.memory_space<vmem>>, %arg8: memref<32x128xbf16, #tpu.memory_space<vmem>>) attributes {dimension_semantics = [#tpu.dimension_semantics<parallel>, #tpu.dimension_semantics<arbitrary>], iteration_bounds = array<i64: 1, 1>, scalar_prefetch = 0 : i64, scratch_operands = 1 : i64, tpu.core_type = #tpu.core_type<tc>, window_params = [{transform_indices = @transform_0, window_bounds = array<i64: 32, 128>}, {pipeline_mode = #tpu.pipeline_mode<synchronous>, transform_indices = @transform_1, window_bounds = array<i64: 1, 128>}, {pipeline_mode = #tpu.pipeline_mode<synchronous>, transform_indices = @transform_2, window_bounds = array<i64: 1, 128>}, {transform_indices = @transform_3, window_bounds = array<i64: 128, 128>}, {transform_indices = @transform_4, window_bounds = array<i64: 1, 128>}, {transform_indices = @transform_5, window_bounds = array<i64: 32, 128>}]} {
    %c0_i32 = arith.constant 0 : i32
    %0 = arith.cmpi eq, %arg1, %c0_i32 : i32
    %1 = arith.extui %0 : i1 to i32
    %c0_i32_0 = arith.constant 0 : i32
    %2 = arith.cmpi ne, %1, %c0_i32_0 : i32
    scf.if %2 {
      %c0_8 = arith.constant 0 : index
      %c0_9 = arith.constant 0 : index
      %10 = vector.load %arg2[%c0_8, %c0_9] : memref<32x128xf32, #tpu.memory_space<vmem>>, vector<32x128xf32>
      %cst_10 = arith.constant dense<0.000000e+00> : vector<32xf32>
      %11 = vector.multi_reduction <add>, %10, %cst_10 [1] : vector<32x128xf32> to vector<32xf32>
      %12 = vector.shape_cast %11 : vector<32xf32> to vector<32x1xf32>
      %cst_11 = arith.constant 1.280000e+02 : f32
      %13 = vector.broadcast %cst_11 : f32 to vector<32x1xf32>
      %14 = arith.divf %12, %13 : vector<32x1xf32>
      %15 = vector.broadcast %14 : vector<32x1xf32> to vector<32x128xf32>
      %16 = arith.subf %10, %15 : vector<32x128xf32>
      %17 = arith.mulf %16, %16 : vector<32x128xf32>
      %cst_12 = arith.constant dense<0.000000e+00> : vector<32xf32>
      %18 = vector.multi_reduction <add>, %17, %cst_12 [1] : vector<32x128xf32> to vector<32xf32>
      %19 = vector.shape_cast %18 : vector<32xf32> to vector<32x1xf32>
      %cst_13 = arith.constant 1.280000e+02 : f32
      %20 = vector.broadcast %cst_13 : f32 to vector<32x1xf32>
      %21 = arith.divf %19, %20 : vector<32x1xf32>
      %cst_14 = arith.constant 9.99999974E-6 : f32
      %22 = vector.broadcast %cst_14 : f32 to vector<32x1xf32>
      %23 = arith.addf %21, %22 : vector<32x1xf32>
      %24 = math.rsqrt %23 : vector<32x1xf32>
      %25 = vector.broadcast %24 : vector<32x1xf32> to vector<32x128xf32>
      %26 = arith.mulf %16, %25 : vector<32x128xf32>
      %c0_15 = arith.constant 0 : index
      %c0_16 = arith.constant 0 : index
      %27 = vector.load %arg3[%c0_15, %c0_16] : memref<1x128xf32, #tpu.memory_space<vmem>>, vector<1x128xf32>
      %28 = vector.broadcast %27 : vector<1x128xf32> to vector<32x128xf32>
      %29 = arith.mulf %26, %28 : vector<32x128xf32>
      %c0_17 = arith.constant 0 : index
      %c0_18 = arith.constant 0 : index
      %30 = vector.load %arg4[%c0_17, %c0_18] : memref<1x128xf32, #tpu.memory_space<vmem>>, vector<1x128xf32>
      %31 = vector.broadcast %30 : vector<1x128xf32> to vector<32x128xf32>
      %32 = arith.addf %29, %31 : vector<32x128xf32>
      %33 = arith.truncf %32 : vector<32x128xf32> to vector<32x128xbf16>
      %c0_19 = arith.constant 0 : index
      %c0_20 = arith.constant 0 : index
      %34 = vector.load %arg8[%c0_19, %c0_20] : memref<32x128xbf16, #tpu.memory_space<vmem>>, vector<32x128xbf16>
      tpu.vector_store %arg8[%c0_19, %c0_20], %33 {strides = array<i32>} : memref<32x128xbf16, #tpu.memory_space<vmem>>, vector<32x128xbf16>,
    } else {
    }
    %c0 = arith.constant 0 : index
    %c0_1 = arith.constant 0 : index
    %3 = vector.load %arg8[%c0, %c0_1] : memref<32x128xbf16, #tpu.memory_space<vmem>>, vector<32x128xbf16>
    %c0_2 = arith.constant 0 : index
    %c0_3 = arith.constant 0 : index
    %4 = vector.load %arg5[%c0_2, %c0_3] : memref<128x128xbf16, #tpu.memory_space<vmem>>, vector<128x128xbf16>
    %cst = arith.constant dense<0.000000e+00> : vector<32x128xf32>
    %5 = tpu.matmul %3, %4, %cst {dimension_numbers = #tpu.dot_dimension_numbers<[1], [0], [0], [1], [0, 0, 1, 1], [], []>} : vector<32x128xbf16>, vector<128x128xbf16>, vector<32x128xf32> -> vector<32x128xf32>
    %c0_4 = arith.constant 0 : index
    %c0_5 = arith.constant 0 : index
    %6 = vector.load %arg6[%c0_4, %c0_5] : memref<1x128xf32, #tpu.memory_space<vmem>>, vector<1x128xf32>
    %7 = vector.broadcast %6 : vector<1x128xf32> to vector<32x128xf32>
    %8 = arith.addf %5, %7 : vector<32x128xf32>
    %c0_6 = arith.constant 0 : index
    %c0_7 = arith.constant 0 : index
    %9 = vector.load %arg7[%c0_6, %c0_7] : memref<32x128xf32, #tpu.memory_space<vmem>>, vector<32x128xf32>
    tpu.vector_store %arg7[%c0_6, %c0_7], %8 {strides = array<i32>} : memref<32x128xf32, #tpu.memory_space<vmem>>, vector<32x128xf32>,
    return
  }
  func.func @transform_0(%arg0: i32, %arg1: i32) -> (i32, i32) {
    %c0_i32 = arith.constant 0 : i32
    %c0_i32_0 = arith.constant 0 : i32
    return %arg0, %c0_i32 : i32, i32
  }
  func.func @transform_1(%arg0: i32, %arg1: i32) -> (i32, i32) {
    %c0_i32 = arith.constant 0 : i32
    %c0_i32_0 = arith.constant 0 : i32
    %c0_i32_1 = arith.constant 0 : i32
    return %c0_i32, %c0_i32_0 : i32, i32
  }
  func.func @transform_2(%arg0: i32, %arg1: i32) -> (i32, i32) {
    %c0_i32 = arith.constant 0 : i32
    %c0_i32_0 = arith.constant 0 : i32
    %c0_i32_1 = arith.constant 0 : i32
    return %c0_i32, %c0_i32_0 : i32, i32
  }
  func.func @transform_3(%arg0: i32, %arg1: i32) -> (i32, i32) {
    %c0_i32 = arith.constant 0 : i32
    %c0_i32_0 = arith.constant 0 : i32
    return %c0_i32, %arg1 : i32, i32
  }
  func.func @transform_4(%arg0: i32, %arg1: i32) -> (i32, i32) {
    %c0_i32 = arith.constant 0 : i32
    %c0_i32_0 = arith.constant 0 : i32
    return %c0_i32, %arg1 : i32, i32
  }
  func.func @transform_5(%arg0: i32, %arg1: i32) -> (i32, i32) {
    %c0_i32 = arith.constant 0 : i32
    return %arg0, %arg1 : i32, i32
  }
}

</mosaic_0001>

<llo_original>
// kernel: tpu_custom_call.1
$region0: #{tpu_custom_call.1}
  #allocation0 [shape = 'u32[]', space=smem, size = 0x4, offset = 0x4, fixed_abs, tag = 'smem constant byte address 0x4 - core index']
  #allocation1 [shape = 'u32[72,128]{1,0:T(1,128)}', space=vmem, size = 0x9000, scoped, tag = 'internal scratch']
  #allocation2 [shape = 'bf16[32,128]{1,0:T(8,128)(2,1)}', space=vmem, size = 0x2000, scoped, tag = 'scratch operand']
  %s0 = inlined_call_operand.hbm [shape: f32[32,128], index: 0, kind: input, shape index: {}]
  %s1 = inlined_call_operand.hbm [shape: f32[1,128], index: 1, kind: input, shape index: {}]
  %s2 = inlined_call_operand.vmem [shape: f32[1,128], index: 2, kind: input, shape index: {}]
  %s3 = inlined_call_operand.hbm [shape: bf16[128,128], index: 3, kind: input, shape index: {}]
  %s4 = inlined_call_operand.vmem [shape: f32[1,128], index: 4, kind: input, shape index: {}]
  %s5 = inlined_call_operand.hbm [shape: f32[32,128], index: 5, kind: output, shape index: {}]
  %s6 = sld [smem:[#allocation0]]
  $region46: #{tpu_custom_call.1} parent=0
    _
  %s8 = ssub.s32 1, %s6
  %s9 = scalar_select 0, %s8, %s6
  $region1: #{tpu_custom_call.1} parent=0
    #allocation3 [shape = 'u8[16384]{0}', space=vmem, size = 0x4000, scoped, tag = 'input window, operand 0, single buffered']
    #allocation4 [shape = 's32[1]{0}', space=sflag, size = 0x4, scoped, tag = 'scoped memory for tpu_custom_call.1']
    #allocation5 [shape = 's32[1]{0}', space=sflag, size = 0x4, scoped, tag = 'scoped memory for tpu_custom_call.1']
    #allocation6 [shape = 'u8[512]{0}', space=vmem, size = 0x400, scoped, tag = 'input window, operand 1, single buffered']
    #allocation7 [shape = 's32[1]{0}', space=sflag, size = 0x4, scoped, tag = 'scoped memory for tpu_custom_call.1']
    #allocation8 [shape = 'u8[32768]{0}', space=vmem, size = 0x8000, scoped, tag = 'input window, operand 3, single buffered']
    #allocation9 [shape = 'u8[16384]{0}', space=vmem, size = 0x4000, scoped, tag = 'output window, operand 0, single buffered']
    %10 = vsyncpa [#allocation4], 0
    %11 = vsyncpa [#allocation7], 0
    %12 = vsyncpa [#allocation5], 0
    // Predicated region
    $region2: #{tpu_custom_call.1} parent=1 // pred_check
      _
    $region3: #{tpu_custom_call.1} parent=1 // pred_check_branch
      %14 = sbr.rel (0) target = $region5
    $region4: #{tpu_custom_call.1} parent=1 // pred_region
      %16 = vsyncadd [#allocation4], 0
      %s17 = sshll.u32 %s0, 4
      %s18 = int_to_ptr.hbm [resolvable:$true] %s17
      %s19 = sshll.u32 [#allocation3], 4
      %s20 = int_to_ptr.vmem [resolvable:$true] %s19
      %25 = dma.hbm_to_vmem [thread:$0]  %s18, 512, %s20, [#allocation4], 128, 128, 8
    $region5: #{tpu_custom_call.1} parent=1 // pred_fallthru
      _
    // Predicated region
    $region6: #{tpu_custom_call.1} parent=1 // pred_check
      _
    $region7: #{tpu_custom_call.1} parent=1 // pred_check_branch
      %27 = sbr.rel (0) target = $region9
    $region8: #{tpu_custom_call.1} parent=1 // pred_region
      %29 = vsyncadd [#allocation7], 0
      %s31 = sshll.u32 %s1, 4
      %s32 = int_to_ptr.hbm [resolvable:$true] %s31
      %s33 = sshll.u32 [#allocation6], 4
      %s34 = int_to_ptr.vmem [resolvable:$true] %s33
      %36 = dma.hbm_to_vmem [thread:$0]  %s32, 16, %s34, [#allocation7]
    $region9: #{tpu_custom_call.1} parent=1 // pred_fallthru
      _
    // Predicated region
    $region10: #{tpu_custom_call.1} parent=1 // pred_check
      _
    $region11: #{tpu_custom_call.1} parent=1 // pred_check_branch
      %38 = sbr.rel (0) target = $region13
    $region12: #{tpu_custom_call.1} parent=1 // pred_region
      _
    $region13: #{tpu_custom_call.1} parent=1 // pred_fallthru
      _
    // Predicated region
    $region14: #{tpu_custom_call.1} parent=1 // pred_check
      _
    $region15: #{tpu_custom_call.1} parent=1 // pred_check_branch
      %40 = sbr.rel (0) target = $region17
    $region16: #{tpu_custom_call.1} parent=1 // pred_region
      %42 = vsyncadd [#allocation7], 0
      %s43 = sshll.u32 %s3, 4
      %s44 = int_to_ptr.hbm [resolvable:$true] %s43
      %s45 = sshll.u32 [#allocation8], 4
      %s46 = int_to_ptr.vmem [resolvable:$true] %s45
      %51 = dma.hbm_to_vmem [thread:$0]  %s44, 1024, %s46, [#allocation7], 64, 64, 4
    $region17: #{tpu_custom_call.1} parent=1 // pred_fallthru
      _
    // Predicated region
    $region18: #{tpu_custom_call.1} parent=1 // pred_check
      _
    $region19: #{tpu_custom_call.1} parent=1 // pred_check_branch
      %53 = sbr.rel (0) target = $region21
    $region20: #{tpu_custom_call.1} parent=1 // pred_region
      _
    $region21: #{tpu_custom_call.1} parent=1 // pred_fallthru
      _
    // Predicated region
    $region22: #{tpu_custom_call.1} parent=1 // pred_check
      _
    $region23: #{tpu_custom_call.1} parent=1 // pred_check_branch
      %55 = sbr.rel (0) target = $region25
    $region24: #{tpu_custom_call.1} parent=1 // pred_region
      %57 = dma.done [#allocation4], 512
    $region25: #{tpu_custom_call.1} parent=1 // pred_fallthru
      _
    // Predicated region
    $region26: #{tpu_custom_call.1} parent=1 // pred_check
      _
    $region27: #{tpu_custom_call.1} parent=1 // pred_check_branch
      %59 = sbr.rel (0) target = $region29
    $region28: #{tpu_custom_call.1} parent=1 // pred_region
      %61 = dma.done [#allocation7], 16
    $region29: #{tpu_custom_call.1} parent=1 // pred_fallthru
      _
    // Predicated region
    $region30: #{tpu_custom_call.1} parent=1 // pred_check
      _
    $region31: #{tpu_custom_call.1} parent=1 // pred_check_branch
      %63 = sbr.rel (0) target = $region33
    $region32: #{tpu_custom_call.1} parent=1 // pred_region
      %65 = dma.done [#allocation7], 1024
    $region33: #{tpu_custom_call.1} parent=1 // pred_fallthru
      _
    %p66 = scmp.eq.s32.totalorder 0, 0
    // Predicated region
    $region34: #{tpu_custom_call.1} parent=1 // pred_check
      %p67 = pneg %p66
    $region35: #{tpu_custom_call.1} parent=1 // pred_check_branch
      %69 = sbr.rel (%p67) target = $region37
    $region36: #{tpu_custom_call.1} parent=1 // pred_region
      %v70 = vld [vmem:[#allocation3] sm:$0xff]
      %v71 = vld [vmem:[#allocation3 + $0x8] sm:$0xff]
      %v72 = vld [vmem:[#allocation3 + $0x10] sm:$0xff]
      %v73 = vld [vmem:[#allocation3 + $0x18] sm:$0xff]
      %74 = vadd.xlane.f32.xlu0 %v70
      %v75 = vpop.xlane.xlu0 %74
      %76 = vadd.xlane.f32.xlu0 %v71
      %v77 = vpop.xlane.xlu0 %76
      %78 = vadd.xlane.f32.xlu0 %v72
      %v79 = vpop.xlane.xlu0 %78
      %80 = vadd.xlane.f32.xlu0 %v73
      %v81 = vpop.xlane.xlu0 %80
      %v82 = vrcp.pop 128.0
      %v83 = vmul.f32 128.0, %v82
      %v84 = vsub.f32 1.0, %v83
      %v85 = vmul.f32 %v82, %v84
      %v86 = vadd.f32 %v82, %v85
      %vm87 = vweird.f32 %v82
      %v88 = vsel %vm87, %v82, %v86
      %v89 = vmul.f32 %v75, %v88
      %v90 = vmul.f32 %v77, %v88
      %v91 = vmul.f32 %v79, %v88
      %v92 = vmul.f32 %v81, %v88
      %v93 = vsub.f32 %v70, %v89
      %v94 = vsub.f32 %v71, %v90
      %v95 = vsub.f32 %v72, %v91
      %v96 = vsub.f32 %v73, %v92
      %v97 = vmul.f32 %v93, %v93
      %v98 = vmul.f32 %v94, %v94
      %v99 = vmul.f32 %v95, %v95
      %v100 = vmul.f32 %v96, %v96
      %101 = vadd.xlane.f32.xlu0 %v97
      %v102 = vpop.xlane.xlu0 %101
      %103 = vadd.xlane.f32.xlu0 %v98
      %v104 = vpop.xlane.xlu0 %103
      %105 = vadd.xlane.f32.xlu0 %v99
      %v106 = vpop.xlane.xlu0 %105
      %107 = vadd.xlane.f32.xlu0 %v100
      %v108 = vpop.xlane.xlu0 %107
      %v109 = vmul.f32 %v102, %v88
      %v110 = vmul.f32 %v104, %v88
      %v111 = vmul.f32 %v106, %v88
      %v112 = vmul.f32 %v108, %v88
      %v113 = vadd.f32 %v109, 1e-05
      %v114 = vadd.f32 %v110, 1e-05
      %v115 = vadd.f32 %v111, 1e-05
      %v116 = vadd.f32 %v112, 1e-05
      %v117 = vrsqrt.pop %v113
      %v118 = vmul.f32 %v117, %v113
      %v119 = vmul.f32 %v118, %v117
      %v120 = vmul.f32 0.5, %v119
      %v121 = vsub.f32 1.5, %v120
      %v122 = vmul.f32 %v117, %v121
      %vm123 = vweird.f32 %v113
      %vm124 = vweird.f32 %v117
      %vm125 = vmor %vm123, %vm124
      %v126 = vsel %vm125, %v117, %v122
      %v127 = vrsqrt.pop %v114
      %v128 = vmul.f32 %v127, %v114
      %v129 = vmul.f32 %v128, %v127
      %v130 = vmul.f32 0.5, %v129
      %v131 = vsub.f32 1.5, %v130
      %v132 = vmul.f32 %v127, %v131
      %vm133 = vweird.f32 %v114
      %vm134 = vweird.f32 %v127
      %vm135 = vmor %vm133, %vm134
      %v136 = vsel %vm135, %v127, %v132
      %v137 = vrsqrt.pop %v115
      %v138 = vmul.f32 %v137, %v115
      %v139 = vmul.f32 %v138, %v137
      %v140 = vmul.f32 0.5, %v139
      %v141 = vsub.f32 1.5, %v140
      %v142 = vmul.f32 %v137, %v141
      %vm143 = vweird.f32 %v115
      %vm144 = vweird.f32 %v137
      %vm145 = vmor %vm143, %vm144
      %v146 = vsel %vm145, %v137, %v142
      %v147 = vrsqrt.pop %v116
      %v148 = vmul.f32 %v147, %v116
      %v149 = vmul.f32 %v148, %v147
      %v150 = vmul.f32 0.5, %v149
      %v151 = vsub.f32 1.5, %v150
      %v152 = vmul.f32 %v147, %v151
      %vm153 = vweird.f32 %v116
      %vm154 = vweird.f32 %v147
      %vm155 = vmor %vm153, %vm154
      %v156 = vsel %vm155, %v147, %v152
      %v157 = vmul.f32 %v93, %v126
      %v158 = vmul.f32 %v94, %v136
      %v159 = vmul.f32 %v95, %v146
      %v160 = vmul.f32 %v96, %v156
      %v161 = vld [vmem:[#allocation6] sm:$0x1]
      %v163 = vperm.slane %v161, 0
      %v165 = vmul.f32 %v157, %v163
      %v166 = vmul.f32 %v158, %v163
      %v167 = vmul.f32 %v159, %v163
      %v168 = vmul.f32 %v160, %v163
      %v169 = vld [vmem:[%s2] sm:$0x1]
      %v171 = vperm.slane %v169, 0
      %v173 = vadd.f32 %v165, %v171
      %v174 = vadd.f32 %v166, %v171
      %v175 = vadd.f32 %v167, %v171
      %v176 = vadd.f32 %v168, %v171
      %v177 = vpack.c.bf16 %v173, %v173
      %v178 = vpack.c.bf16 %v174, %v174
      %v179 = vpack.c.bf16 %v175, %v175
      %v180 = vpack.c.bf16 %v176, %v176
      %181 = vst [vmem:[#allocation2] sm:$0xf] %v177
      %182 = vst [vmem:[#allocation2 + $0x4] sm:$0xf] %v178
      %183 = vst [vmem:[#allocation2 + $0x8] sm:$0xf] %v179
      %184 = vst [vmem:[#allocation2 + $0xc] sm:$0xf] %v180
    $region37: #{tpu_custom_call.1} parent=1 // pred_fallthru
      _
    %v185 = vld [vmem:[#allocation2] sm:$0xf]
    %v186 = vld [vmem:[#allocation2 + $0x4] sm:$0xf]
    %v187 = vld [vmem:[#allocation2 + $0x8] sm:$0xf]
    %v188 = vld [vmem:[#allocation2 + $0xc] sm:$0xf]
    %v189 = vld [vmem:[#allocation8] sm:$0xf]
    %v190 = vld [vmem:[#allocation8 + $0x4] sm:$0xf]
    %v191 = vld [vmem:[#allocation8 + $0x8] sm:$0xf]
    %v192 = vld [vmem:[#allocation8 + $0xc] sm:$0xf]
    %v193 = vld [vmem:[#allocation8 + $0x10] sm:$0xf]
    %v194 = vld [vmem:[#allocation8 + $0x14] sm:$0xf]
    %v195 = vld [vmem:[#allocation8 + $0x18] sm:$0xf]
    %v196 = vld [vmem:[#allocation8 + $0x1c] sm:$0xf]
    %v197 = vld [vmem:[#allocation8 + $0x20] sm:$0xf]
    %v198 = vld [vmem:[#allocation8 + $0x24] sm:$0xf]
    %v199 = vld [vmem:[#allocation8 + $0x28] sm:$0xf]
    %v200 = vld [vmem:[#allocation8 + $0x2c] sm:$0xf]
    %v201 = vld [vmem:[#allocation8 + $0x30] sm:$0xf]
    %v202 = vld [vmem:[#allocation8 + $0x34] sm:$0xf]
    %v203 = vld [vmem:[#allocation8 + $0x38] sm:$0xf]
    %v204 = vld [vmem:[#allocation8 + $0x3c] sm:$0xf]
    %v205 = vld [vmem:[%s4] sm:$0x1]
    %v207 = vperm.slane %v205, 0
    %v213 = vunpack.c.l.b16 %v185
    %v214 = vunpack.c.l.b16 %v186
    %v215 = vunpack.c.l.b16 %v187
    %v216 = vunpack.c.l.b16 %v188
    %v217 = vpack.c.b16 %v214, %v213
    %v218 = vpack.c.b16 %v216, %v215
    %v237 = vunpack.c.l.b16 %v189
    %v238 = vunpack.c.l.b16 %v190
    %v239 = vunpack.c.l.b16 %v191
    %v240 = vunpack.c.l.b16 %v192
    %v241 = vunpack.c.l.b16 %v193
    %v242 = vunpack.c.l.b16 %v194
    %v243 = vunpack.c.l.b16 %v195
    %v244 = vunpack.c.l.b16 %v196
    %v245 = vunpack.c.l.b16 %v197
    %v246 = vunpack.c.l.b16 %v198
    %v247 = vunpack.c.l.b16 %v199
    %v248 = vunpack.c.l.b16 %v200
    %v249 = vunpack.c.l.b16 %v201
    %v250 = vunpack.c.l.b16 %v202
    %v251 = vunpack.c.l.b16 %v203
    %v252 = vunpack.c.l.b16 %v204
    %v253 = vpack.c.b16 %v238, %v237
    %v254 = vpack.c.b16 %v240, %v239
    %v255 = vpack.c.b16 %v242, %v241
    %v256 = vpack.c.b16 %v244, %v243
    %v257 = vpack.c.b16 %v246, %v245
    %v258 = vpack.c.b16 %v248, %v247
    %v259 = vpack.c.b16 %v250, %v249
    %v260 = vpack.c.b16 %v252, %v251
    %269 = vmatpush.bf16.msra.mxu0 %v260
    %270 = vmatpush.bf16.msra.mxu0 %v259
    %271 = vmatpush.bf16.msra.mxu0 %v258
    %272 = vmatpush.bf16.msra.mxu0 %v257
    %273 = vmatpush.bf16.msra.mxu0 %v256
    %274 = vmatpush.bf16.msra.mxu0 %v255
    %275 = vmatpush.bf16.msra.mxu0 %v254
    %276 = vmatpush.bf16.msra.mxu0 %v253
    %277 = vmatmul.bf16.gmra.mxu0 %v217
    %v278 = vpop.f32.mrf.mxu0
    %v279 = vadd.f32 %v207, %v278
    %v280 = vpop.f32.mrf.mxu0
    %v281 = vadd.f32 %v207, %v280
    %282 = vmatmul.bf16.gmra.mxu0 %v218
    %v283 = vpop.f32.mrf.mxu0
    %v284 = vadd.f32 %v207, %v283
    %v285 = vpop.f32.mrf.mxu0
    %v286 = vadd.f32 %v207, %v285
    %287 = vdwg.mxu0
    %288 = vst [vmem:[#allocation9] sm:$0xff] %v279
    %289 = vst [vmem:[#allocation9 + $0x8] sm:$0xff] %v281
    %290 = vst [vmem:[#allocation9 + $0x10] sm:$0xff] %v284
    %291 = vst [vmem:[#allocation9 + $0x18] sm:$0xff] %v286
    // Predicated region
    $region38: #{tpu_custom_call.1} parent=1 // pred_check
      _
    $region39: #{tpu_custom_call.1} parent=1 // pred_check_branch
      %293 = sbr.rel (0) target = $region41
    $region40: #{tpu_custom_call.1} parent=1 // pred_region
      %295 = vsyncadd [#allocation5], 0
      %s296 = sshll.u32 [#allocation9], 4
      %s297 = int_to_ptr.vmem [resolvable:$true] %s296
      %s298 = sshll.u32 %s5, 4
      %s299 = int_to_ptr.hbm [resolvable:$true] %s298
      %304 = dma.vmem_to_hbm [thread:$0]  %s297, 512, %s299, [#allocation5], 128, 128, 8
    $region41: #{tpu_custom_call.1} parent=1 // pred_fallthru
      _
    // Predicated region
    $region42: #{tpu_custom_call.1} parent=1 // pred_check
      _
    $region43: #{tpu_custom_call.1} parent=1 // pred_check_branch
      %306 = sbr.rel (0) target = $region45
    $region44: #{tpu_custom_call.1} parent=1 // pred_region
      %308 = dma.done [#allocation5], 512
    $region45: #{tpu_custom_call.1} parent=1 // pred_fallthru
      _
    %309 = vsyncpa [#allocation4], 1
    %310 = vsyncpa [#allocation7], 1
    %311 = vsyncpa [#allocation5], 1

</llo_original>
